<compile_context>
chip_gen: v7x
topology: tpu7x:2x2x1
jax: 0.10.0
libtpu: 0.0.40
codegen_flags: <defaults>
</compile_context>

<pallas_src>
import functools

import jax
import jax.numpy as jnp
from jax.experimental import pallas as pl
from jax.experimental.pallas import tpu as pltpu

_LANE = 128           # lane width: H / O padded to multiples of this
_SUBLANE = 8          # f32 sublane alignment for batch tiles
_MAX_BATCH_TILE = 512
_MAX_H_TILE = 512


def _round_up(n, m):
    return ((n + m - 1) // m) * m


def _cdiv(a, b):
    return (a + b - 1) // b


def _mlp_kernel(x_ref, w1_ref, b1_ref, w2_ref, b2_ref, o_ref, acc_ref, *,
                activation_type):
    """One (batch-tile, hidden-chunk) grid step.

    Layer 1 for this hidden chunk, activation, then the partial layer-2
    contribution accumulated into f32 VMEM scratch.  The output tile is
    resident across the hidden axis (its block index only depends on the batch
    index) and is written once, on the last hidden chunk (lane-dense stores).
    """
    h_idx = pl.program_id(1)

    @pl.when(h_idx == 0)
    def _init():
        acc_ref[...] = jnp.zeros_like(acc_ref)

    # Layer 1: (Bt, F) bf16 @ (F, Ht) bf16 -> f32 on the MXU.  x is cast to
    # bf16 in-kernel (VPU) so the wrapper never streams a casted copy via HBM.
    x_bf16 = x_ref[...].astype(jnp.bfloat16)
    h = jnp.dot(x_bf16, w1_ref[...], preferred_element_type=jnp.float32)
    h = h + b1_ref[...]                     # f32 bias add, broadcast over rows

    if activation_type == "relu":
        h = jnp.maximum(h, 0.0)
    else:                                   # "sin" (validated at construction)
        h = jnp.sin(h)

    # Layer 2 partial: (Bt, Ht) bf16 @ (Ht, O_pad) bf16 -> accumulate in f32.
    acc_ref[...] += jnp.dot(h.astype(jnp.bfloat16), w2_ref[...],
                            preferred_element_type=jnp.float32)

    @pl.when(h_idx == pl.num_programs(1) - 1)
    def _finalize():
        # O_pad is a multiple of 128 -> lane-dense, unmasked stores.
        o_ref[...] = (acc_ref[...] + b2_ref[...]).astype(o_ref.dtype)


def make_generic_mlp(w1, b1, w2, b2, activation_type="relu"):
    """Prepare weights once; return a jitted forward fn mapping x -> (B, O).

    w1: (H, F), b1: (H,), w2: (O, H), b2: (O,)   (PyTorch nn.Linear layout)
    """
    if activation_type not in ("relu", "sin"):
        raise ValueError(f"Unsupported activation type '{activation_type}'")

    H, F = w1.shape
    O, H2 = w2.shape
    assert H2 == H

    H_pad = _round_up(H, _LANE)
    O_pad = _round_up(O, _LANE)

    # Hidden-chunk size: the largest multiple of 128 (<= _MAX_H_TILE) dividing H_pad.
    H_tile = _LANE
    for cand in range(min(H_pad, _MAX_H_TILE), _LANE - 1, -_LANE):
        if H_pad % cand == 0:
            H_tile = cand
            break
    n_h = H_pad // H_tile

    # One-time weight prep: transpose, zero-pad H/O to lane multiples, cast to
    # bf16 (biases stay f32).  F is deliberately NOT padded: the x / w1 blocks
    # use the full-array-dim exemption and Mosaic pads the contraction
    # internally, so the wrapper never has to re-pad activations per call.
    # Zero-padded hidden cols give relu(0)=sin(0)=0 and hit zero rows of w2.
    w1_p = jnp.pad(jnp.asarray(w1, jnp.float32).T.astype(jnp.bfloat16),
                   ((0, 0), (0, H_pad - H)))                 # (F, H_pad)
    w2_p = jnp.pad(jnp.asarray(w2, jnp.float32).T.astype(jnp.bfloat16),
                   ((0, H_pad - H), (0, O_pad - O)))         # (H_pad, O_pad)
    b1_p = jnp.pad(jnp.asarray(b1, jnp.float32).reshape(1, H),
                   ((0, 0), (0, H_pad - H)))                 # (1, H_pad)
    b2_p = jnp.pad(jnp.asarray(b2, jnp.float32).reshape(1, O),
                   ((0, 0), (0, O_pad - O)))                 # (1, O_pad)

    kernel = functools.partial(_mlp_kernel, activation_type=activation_type)

    # Chip VMEM capacity for clamping the scoped-VMEM request (v7x-safe fallback).
    try:
        _vmem_cap = int(pltpu.get_tpu_info().vmem_capacity_bytes)
    except Exception:
        _vmem_cap = 64 * 1024 * 1024
    _vmem_cap_usable = int(0.85 * _vmem_cap)

    @jax.jit
    def forward(x):
        B = x.shape[0]
        x2d = x.reshape(B, -1)
        if x2d.shape[1] != F:
            raise ValueError(f"flattened feature dim {x2d.shape[1]} != {F}")

        # Batch tiling: >=2 tiles whenever the batch is big enough so the
        # "parallel" axis keeps both v7x TensorCores busy; even split of B
        # (e.g. 300 -> 2x152) rather than full tiles + a heavily padded tail.
        n_b = _cdiv(B, _MAX_BATCH_TILE)
        if n_b == 1 and B >= 2 * _SUBLANE:
            n_b = 2
        if n_b == 1:
            B_tile, B_pad = B, B            # full-dim block: no pad, no extra HBM pass
        else:
            B_tile = _round_up(_cdiv(B, n_b), _SUBLANE)
            B_pad = n_b * B_tile
        if B_pad != B:
            x2d = jnp.pad(x2d, ((0, B_pad - B), (0, 0)))

        # Buffer counts: single buffer for grid-invariant blocks, double for
        # streamed ones (pipelining).
        nbuf_x = 1 if n_b == 1 else 2
        nbuf_w = 1 if n_h == 1 else 2

        x_itemsize = jnp.dtype(x2d.dtype).itemsize
        footprint = (
            nbuf_x * B_tile * F * x_itemsize              # x tiles
            + nbuf_w * (F * H_tile * 2                    # w1 chunks (bf16)
                        + _SUBLANE * H_tile * 4           # b1 chunks (f32)
                        + H_tile * O_pad * 2)             # w2 chunks (bf16)
            + _SUBLANE * O_pad * 4                        # b2 (f32)
            + 2 * B_tile * O_pad * 4                      # out tiles (f32)
            + B_tile * O_pad * 4                          # acc scratch (f32)
            + B_tile * H_tile * 4                         # live hidden tile
        )
        vmem_limit = max(32 * 1024 * 1024,
                         min(int(1.5 * footprint) + (4 << 20), _vmem_cap_usable))

        def _spec(shape, index_map, n_buffers):
            if n_buffers == 1:
                # Grid-invariant block: one VMEM buffer is enough; double
                # buffering would only burn VMEM.
                return pl.BlockSpec(shape, index_map, pipeline_mode=pl.Buffered(1))
            return pl.BlockSpec(shape, index_map)

        out = pl.pallas_call(
            kernel,
            out_shape=jax.ShapeDtypeStruct((B_pad, O_pad), jnp.float32),
            grid_spec=pltpu.PrefetchScalarGridSpec(
                num_scalar_prefetch=0,
                grid=(n_b, n_h),
                in_specs=[
                    _spec((B_tile, F), lambda i, h: (i, 0), nbuf_x),      # x tile
                    _spec((F, H_tile), lambda i, h: (0, h), nbuf_w),      # w1 chunk
                    _spec((1, H_tile), lambda i, h: (0, h), nbuf_w),      # b1 chunk
                    _spec((H_tile, O_pad), lambda i, h: (h, 0), nbuf_w),  # w2 chunk
                    _spec((1, O_pad), lambda i, h: (0, 0), 1),            # b2 (invariant)
                ],
                out_specs=pl.BlockSpec((B_tile, O_pad), lambda i, h: (i, 0)),
                scratch_shapes=[pltpu.VMEM((B_tile, O_pad), jnp.float32)],
            ),
            compiler_params=pltpu.CompilerParams(
                dimension_semantics=("parallel", "arbitrary"),
                vmem_limit_bytes=vmem_limit,
            ),
        )(x2d, w1_p, b1_p, w2_p, b2_p)

        if B_pad == B and O_pad == O:
            return out
        # TODO(synk): let callers opt into the padded slab / bf16 output to
        # skip this extra HBM pass when O << O_pad.
        return out[:B, :O]

    return forward


# ----------------------------- references ----------------------------------

def _reference_mlp_f32(x, w1, b1, w2, b2, activation_type):
    """Pure-f32 reference mirroring the PyTorch forward."""
    x2d = x.reshape(x.shape[0], -1)
    h = x2d @ w1.T + b1
    h = jnp.maximum(h, 0.0) if activation_type == "relu" else jnp.sin(h)
    return h @ w2.T + b2


def _reference_mlp_bf16_operands(x, w1, b1, w2, b2, activation_type):
    """Reference with the same bf16 operand quantization / f32 accumulation."""
    q = lambda a: jnp.asarray(a, jnp.float32).astype(jnp.bfloat16).astype(jnp.float32)
    x2d = q(x.reshape(x.shape[0], -1))
    h = x2d @ q(w1).T + jnp.asarray(b1, jnp.float32)
    h = jnp.maximum(h, 0.0) if activation_type == "relu" else jnp.sin(h)
    return q(h) @ q(w2).T + jnp.asarray(b2, jnp.float32)


def _init_linear(key, out_features, in_features):
    """Deterministic init following nn.Linear defaults (uniform +/- 1/sqrt(fan_in))."""
    k_w, k_b = jax.random.split(key)
    bound = 1.0 / jnp.sqrt(in_features)
    w = jax.random.uniform(k_w, (out_features, in_features),
                           minval=-bound, maxval=bound, dtype=jnp.float32)
    b = jax.random.uniform(k_b, (out_features,),
                           minval=-bound, maxval=bound, dtype=jnp.float32)
    return w, b


def _check(x, w1, b1, w2, b2, act):
    mlp = make_generic_mlp(w1, b1, w2, b2, activation_type=act)
    out = jax.block_until_ready(mlp(x))
    assert out.shape == (x.shape[0], w2.shape[0]), out.shape
    ref_q = _reference_mlp_bf16_operands(x, w1, b1, w2, b2, act)
    ref_f = _reference_mlp_f32(x, w1, b1, w2, b2, act)
    assert jnp.allclose(out, ref_q, atol=1e-3, rtol=1e-3), \
        f"{act}: mismatch vs bf16-operand reference"
    assert jnp.allclose(out, ref_f, atol=1e-1, rtol=1e-1), \
        f"{act}: drifted too far from f32 reference"


if __name__ == "__main__":
    key = jax.random.PRNGKey(0)
    k_x, k_l1, k_l2, k_x2, k_l3, k_l4 = jax.random.split(key, 6)

    # Spec-sized demo: batch=2, input (2, 4, 16) -> flattened input_size = 64,
    # hidden_size = 32, output_size = 16 (single-tile grid, single H chunk).
    batch, in_c, in_l = 2, 4, 16
    input_size = in_c * in_l        # 64
    hidden_size = 32
    output_size = 16

    x = jax.random.normal(k_x, (batch, in_c, in_l), dtype=jnp.float32)
    w1, b1 = _init_linear(k_l1, hidden_size, input_size)
    w2, b2 = _init_linear(k_l2, output_size, hidden_size)

    for act in ("relu", "sin"):
        _check(x, w1, b1, w2, b2, act)

    # Second config exercising the multi-tile paths: 2 batch tiles (megacore
    # split) and 5 hidden chunks through the reduction axis + accumulator.
    batch2, hidden2 = 48, 640
    x2 = jax.random.normal(k_x2, (batch2, in_c, in_l), dtype=jnp.float32)
    w1b, b1b = _init_linear(k_l3, hidden2, input_size)
    w2b, b2b = _init_linear(k_l4, output_size, hidden2)

    for act in ("relu", "sin"):
        _check(x2, w1b, b1b, w2b, b2b, act)

    print("KERNEL_OK")
</pallas_src>

<mosaic_0001>
module attributes {stable_mosaic.version = 11 : i64} {
  func.func @_mlp_kernel(%arg0: i32, %arg1: i32, %arg2: memref<2x64xf32, #tpu.memory_space<vmem>>, %arg3: memref<64x128xbf16, #tpu.memory_space<vmem>>, %arg4: memref<1x128xf32, #tpu.memory_space<vmem>>, %arg5: memref<128x128xbf16, #tpu.memory_space<vmem>>, %arg6: memref<1x128xf32, #tpu.memory_space<vmem>>, %arg7: memref<2x128xf32, #tpu.memory_space<vmem>>, %arg8: memref<2x128xf32, #tpu.memory_space<vmem>>) attributes {dimension_semantics = [#tpu.dimension_semantics<parallel>, #tpu.dimension_semantics<arbitrary>], iteration_bounds = array<i64: 1, 1>, scalar_prefetch = 0 : i64, scratch_operands = 1 : i64, tpu.core_type = #tpu.core_type<tc>, window_params = [{pipeline_mode = #tpu.pipeline_mode<synchronous>, transform_indices = @transform_0, window_bounds = array<i64: 2, 64>}, {pipeline_mode = #tpu.pipeline_mode<synchronous>, transform_indices = @transform_1, window_bounds = array<i64: 64, 128>}, {pipeline_mode = #tpu.pipeline_mode<synchronous>, transform_indices = @transform_2, window_bounds = array<i64: 1, 128>}, {pipeline_mode = #tpu.pipeline_mode<synchronous>, transform_indices = @transform_3, window_bounds = array<i64: 128, 128>}, {pipeline_mode = #tpu.pipeline_mode<synchronous>, transform_indices = @transform_4, window_bounds = array<i64: 1, 128>}, {transform_indices = @transform_5, window_bounds = array<i64: 2, 128>}]} {
    %c0_i32 = arith.constant 0 : i32
    %0 = arith.cmpi eq, %arg1, %c0_i32 : i32
    %1 = arith.extui %0 : i1 to i32
    %c0_i32_0 = arith.constant 0 : i32
    %2 = arith.cmpi ne, %1, %c0_i32_0 : i32
    scf.if %2 {
      %cst_16 = arith.constant 0.000000e+00 : f32
      %21 = vector.broadcast %cst_16 : f32 to vector<2x128xf32>
      %c0_17 = arith.constant 0 : index
      %c0_18 = arith.constant 0 : index
      %22 = vector.load %arg8[%c0_17, %c0_18] : memref<2x128xf32, #tpu.memory_space<vmem>>, vector<2x128xf32>
      tpu.vector_store %arg8[%c0_17, %c0_18], %21 {strides = array<i32>} : memref<2x128xf32, #tpu.memory_space<vmem>>, vector<2x128xf32>,
    } else {
    }
    %c0 = arith.constant 0 : index
    %c0_1 = arith.constant 0 : index
    %3 = vector.load %arg2[%c0, %c0_1] : memref<2x64xf32, #tpu.memory_space<vmem>>, vector<2x64xf32>
    %4 = arith.truncf %3 : vector<2x64xf32> to vector<2x64xbf16>
    %c0_2 = arith.constant 0 : index
    %c0_3 = arith.constant 0 : index
    %5 = vector.load %arg3[%c0_2, %c0_3] : memref<64x128xbf16, #tpu.memory_space<vmem>>, vector<64x128xbf16>
    %cst = arith.constant dense<0.000000e+00> : vector<2x128xf32>
    %6 = tpu.matmul %4, %5, %cst {dimension_numbers = #tpu.dot_dimension_numbers<[1], [0], [0], [1], [0, 0, 1, 1], [], []>} : vector<2x64xbf16>, vector<64x128xbf16>, vector<2x128xf32> -> vector<2x128xf32>
    %c0_4 = arith.constant 0 : index
    %c0_5 = arith.constant 0 : index
    %7 = vector.load %arg4[%c0_4, %c0_5] : memref<1x128xf32, #tpu.memory_space<vmem>>, vector<1x128xf32>
    %8 = vector.broadcast %7 : vector<1x128xf32> to vector<2x128xf32>
    %9 = arith.addf %6, %8 : vector<2x128xf32>
    %cst_6 = arith.constant 0.000000e+00 : f32
    %10 = vector.broadcast %cst_6 : f32 to vector<2x128xf32>
    %11 = arith.maximumf %9, %10 : vector<2x128xf32>
    %c0_7 = arith.constant 0 : index
    %c0_8 = arith.constant 0 : index
    %12 = vector.load %arg8[%c0_7, %c0_8] : memref<2x128xf32, #tpu.memory_space<vmem>>, vector<2x128xf32>
    %13 = arith.truncf %11 : vector<2x128xf32> to vector<2x128xbf16>
    %c0_9 = arith.constant 0 : index
    %c0_10 = arith.constant 0 : index
    %14 = vector.load %arg5[%c0_9, %c0_10] : memref<128x128xbf16, #tpu.memory_space<vmem>>, vector<128x128xbf16>
    %cst_11 = arith.constant dense<0.000000e+00> : vector<2x128xf32>
    %15 = tpu.matmul %13, %14, %cst_11 {dimension_numbers = #tpu.dot_dimension_numbers<[1], [0], [0], [1], [0, 0, 1, 1], [], []>} : vector<2x128xbf16>, vector<128x128xbf16>, vector<2x128xf32> -> vector<2x128xf32>
    %16 = arith.addf %12, %15 : vector<2x128xf32>
    %c0_12 = arith.constant 0 : index
    %c0_13 = arith.constant 0 : index
    %17 = vector.load %arg8[%c0_12, %c0_13] : memref<2x128xf32, #tpu.memory_space<vmem>>, vector<2x128xf32>
    tpu.vector_store %arg8[%c0_12, %c0_13], %16 {strides = array<i32>} : memref<2x128xf32, #tpu.memory_space<vmem>>, vector<2x128xf32>,
    %c0_i32_14 = arith.constant 0 : i32
    %18 = arith.cmpi eq, %arg1, %c0_i32_14 : i32
    %19 = arith.extui %18 : i1 to i32
    %c0_i32_15 = arith.constant 0 : i32
    %20 = arith.cmpi ne, %19, %c0_i32_15 : i32
    scf.if %20 {
      %c0_16 = arith.constant 0 : index
      %c0_17 = arith.constant 0 : index
      %21 = vector.load %arg8[%c0_16, %c0_17] : memref<2x128xf32, #tpu.memory_space<vmem>>, vector<2x128xf32>
      %c0_18 = arith.constant 0 : index
      %c0_19 = arith.constant 0 : index
      %22 = vector.load %arg6[%c0_18, %c0_19] : memref<1x128xf32, #tpu.memory_space<vmem>>, vector<1x128xf32>
      %23 = vector.broadcast %22 : vector<1x128xf32> to vector<2x128xf32>
      %24 = arith.addf %21, %23 : vector<2x128xf32>
      %c0_20 = arith.constant 0 : index
      %c0_21 = arith.constant 0 : index
      %25 = vector.load %arg7[%c0_20, %c0_21] : memref<2x128xf32, #tpu.memory_space<vmem>>, vector<2x128xf32>
      tpu.vector_store %arg7[%c0_20, %c0_21], %24 {strides = array<i32>} : memref<2x128xf32, #tpu.memory_space<vmem>>, vector<2x128xf32>,
    } else {
    }
    return
  }
  func.func @transform_0(%arg0: i32, %arg1: i32) -> (i32, i32) {
    %c0_i32 = arith.constant 0 : i32
    %c0_i32_0 = arith.constant 0 : i32
    return %arg0, %c0_i32 : i32, i32
  }
  func.func @transform_1(%arg0: i32, %arg1: i32) -> (i32, i32) {
    %c0_i32 = arith.constant 0 : i32
    %c0_i32_0 = arith.constant 0 : i32
    return %c0_i32, %arg1 : i32, i32
  }
  func.func @transform_2(%arg0: i32, %arg1: i32) -> (i32, i32) {
    %c0_i32 = arith.constant 0 : i32
    %c0_i32_0 = arith.constant 0 : i32
    return %c0_i32, %arg1 : i32, i32
  }
  func.func @transform_3(%arg0: i32, %arg1: i32) -> (i32, i32) {
    %c0_i32 = arith.constant 0 : i32
    %c0_i32_0 = arith.constant 0 : i32
    return %arg1, %c0_i32 : i32, i32
  }
  func.func @transform_4(%arg0: i32, %arg1: i32) -> (i32, i32) {
    %c0_i32 = arith.constant 0 : i32
    %c0_i32_0 = arith.constant 0 : i32
    %c0_i32_1 = arith.constant 0 : i32
    return %c0_i32, %c0_i32_0 : i32, i32
  }
  func.func @transform_5(%arg0: i32, %arg1: i32) -> (i32, i32) {
    %c0_i32 = arith.constant 0 : i32
    %c0_i32_0 = arith.constant 0 : i32
    return %arg0, %c0_i32 : i32, i32
  }
}

</mosaic_0001>

<llo_original>
// kernel: forward.1
$region0: #{forward.1}
  #allocation0 [shape = 'u32[]', space=smem, size = 0x4, offset = 0x4, fixed_abs, tag = 'smem constant byte address 0x4 - core index']
  #allocation1 [shape = 'u32[144,128]{1,0:T(1,128)}', space=vmem, size = 0x12000, scoped, tag = 'internal scratch']
  #allocation2 [shape = 'f32[2,128]{1,0:T(2,128)}', space=vmem, size = 0x400, scoped, tag = 'scratch operand']
  %s0 = inlined_call_operand.vmem [shape: f32[2,64], index: 0, kind: input, shape index: {}]
  %s1 = inlined_call_operand.hbm [shape: bf16[64,128], index: 1, kind: input, shape index: {}]
  %s2 = inlined_call_operand.vmem [shape: f32[1,128], index: 2, kind: input, shape index: {}]
  %s3 = inlined_call_operand.hbm [shape: bf16[128,128], index: 3, kind: input, shape index: {}]
  %s4 = inlined_call_operand.vmem [shape: f32[1,128], index: 4, kind: input, shape index: {}]
  %s5 = inlined_call_operand.hbm [shape: f32[2,128], index: 5, kind: output, shape index: {}]
  %s6 = sld [smem:[#allocation0]]
  $region46: #{forward.1} parent=0
    _
  %s8 = ssub.s32 1, %s6
  %s9 = scalar_select 0, %s8, %s6
  $region1: #{forward.1} parent=0
    #allocation3 [shape = 'u8[16384]{0}', space=vmem, size = 0x4000, scoped, tag = 'input window, operand 1, single buffered']
    #allocation4 [shape = 's32[1]{0}', space=sflag, size = 0x4, scoped, tag = 'scoped memory for forward.1']
    #allocation5 [shape = 's32[1]{0}', space=sflag, size = 0x4, scoped, tag = 'scoped memory for forward.1']
    #allocation6 [shape = 'u8[32768]{0}', space=vmem, size = 0x8000, scoped, tag = 'input window, operand 3, single buffered']
    #allocation7 [shape = 's32[1]{0}', space=sflag, size = 0x4, scoped, tag = 'scoped memory for forward.1']
    #allocation8 [shape = 'u8[1024]{0}', space=vmem, size = 0x400, scoped, tag = 'output window, operand 0, single buffered']
    %10 = vsyncpa [#allocation4], 0
    %11 = vsyncpa [#allocation7], 0
    %12 = vsyncpa [#allocation5], 0
    // Predicated region
    $region2: #{forward.1} parent=1 // pred_check
      _
    $region3: #{forward.1} parent=1 // pred_check_branch
      %14 = sbr.rel (0) target = $region5
    $region4: #{forward.1} parent=1 // pred_region
      _
    $region5: #{forward.1} parent=1 // pred_fallthru
      _
    // Predicated region
    $region6: #{forward.1} parent=1 // pred_check
      _
    $region7: #{forward.1} parent=1 // pred_check_branch
      %16 = sbr.rel (0) target = $region9
    $region8: #{forward.1} parent=1 // pred_region
      %s18 = ssub.s32 512, 512
      %19 = vsyncadd [#allocation4], %s18
      %s20 = sshll.u32 [#allocation3], 4
      %s21 = int_to_ptr.vmem [resolvable:$true] %s20
      %26 = dma.hbm_to_vmem [thread:$0]  %s1, 512, %s21, [#allocation4], 64, 64, 4
    $region9: #{forward.1} parent=1 // pred_fallthru
      _
    // Predicated region
    $region10: #{forward.1} parent=1 // pred_check
      _
    $region11: #{forward.1} parent=1 // pred_check_branch
      %28 = sbr.rel (0) target = $region13
    $region12: #{forward.1} parent=1 // pred_region
      _
    $region13: #{forward.1} parent=1 // pred_fallthru
      _
    // Predicated region
    $region14: #{forward.1} parent=1 // pred_check
      _
    $region15: #{forward.1} parent=1 // pred_check_branch
      %30 = sbr.rel (0) target = $region17
    $region16: #{forward.1} parent=1 // pred_region
      %s32 = ssub.s32 1024, 1024
      %33 = vsyncadd [#allocation7], %s32
      %s34 = sshll.u32 [#allocation6], 4
      %s35 = int_to_ptr.vmem [resolvable:$true] %s34
      %40 = dma.hbm_to_vmem [thread:$0]  %s3, 1024, %s35, [#allocation7], 64, 64, 4
    $region17: #{forward.1} parent=1 // pred_fallthru
      _
    // Predicated region
    $region18: #{forward.1} parent=1 // pred_check
      _
    $region19: #{forward.1} parent=1 // pred_check_branch
      %42 = sbr.rel (0) target = $region21
    $region20: #{forward.1} parent=1 // pred_region
      _
    $region21: #{forward.1} parent=1 // pred_fallthru
      _
    // Predicated region
    $region22: #{forward.1} parent=1 // pred_check
      _
    $region23: #{forward.1} parent=1 // pred_check_branch
      %44 = sbr.rel (0) target = $region25
    $region24: #{forward.1} parent=1 // pred_region
      %45 = dma.done [#allocation4], 512
    $region25: #{forward.1} parent=1 // pred_fallthru
      _
    // Predicated region
    $region26: #{forward.1} parent=1 // pred_check
      _
    $region27: #{forward.1} parent=1 // pred_check_branch
      %47 = sbr.rel (0) target = $region29
    $region28: #{forward.1} parent=1 // pred_region
      %48 = dma.done [#allocation7], 1024
    $region29: #{forward.1} parent=1 // pred_fallthru
      _
    %p50 = scmp.eq.s32.totalorder 0, 0
    // Predicated region
    $region30: #{forward.1} parent=1 // pred_check
      %p51 = pneg %p50
    $region31: #{forward.1} parent=1 // pred_check_branch
      %53 = sbr.rel (%p51) target = $region33
    $region32: #{forward.1} parent=1 // pred_region
      %54 = vst [vmem:[#allocation2] sm:$0x3] 0.0
    $region33: #{forward.1} parent=1 // pred_fallthru
      _
    %v55 = vld [vmem:[%s0] sm:$0x3]
    %v56 = vpack.c.bf16 %v55, %v55
    %v57 = vld [vmem:[#allocation3] sm:$0xf]
    %v58 = vld [vmem:[#allocation3 + $0x4] sm:$0xf]
    %v59 = vld [vmem:[#allocation3 + $0x8] sm:$0xf]
    %v60 = vld [vmem:[#allocation3 + $0xc] sm:$0xf]
    %v61 = vld [vmem:[#allocation3 + $0x10] sm:$0xf]
    %v62 = vld [vmem:[#allocation3 + $0x14] sm:$0xf]
    %v63 = vld [vmem:[#allocation3 + $0x18] sm:$0xf]
    %v64 = vld [vmem:[#allocation3 + $0x1c] sm:$0xf]
    %v65 = vld [vmem:[%s2] sm:$0x1]
    %v67 = vlaneseq
    %v68 = vshrl.u32 %v67, 7
    %v69 = vsub.s32 0, %v68
    %v70 = vrot.slane %v65, %v69
    %v80 = vunpack.c.l.b16 %v57
    %v81 = vunpack.c.l.b16 %v58
    %v82 = vunpack.c.l.b16 %v59
    %v83 = vunpack.c.l.b16 %v60
    %v84 = vunpack.c.l.b16 %v61
    %v85 = vunpack.c.l.b16 %v62
    %v86 = vunpack.c.l.b16 %v63
    %v87 = vunpack.c.l.b16 %v64
    %v88 = vpack.c.b16 %v81, %v80
    %v89 = vpack.c.b16 %v83, %v82
    %v90 = vpack.c.b16 %v85, %v84
    %v91 = vpack.c.b16 %v87, %v86
    %vm96 = vcmask 523264
    %v98 = vsel %vm96, %v56, 0
    %100 = vmatprep.subr.bf16.mxu0 0
    %101 = vmatpush1.bf16.msra.mxu0 %v88
    %102 = vmatprep.subr.bf16.mxu0 0
    %103 = vmatpush1.bf16.msra.mxu0 %v89
    %104 = vmatprep.subr.bf16.mxu0 0
    %105 = vmatpush1.bf16.msra.mxu0 %v90
    %106 = vmatprep.subr.bf16.mxu0 0
    %107 = vmatpush1.bf16.msra.mxu0 %v91
    %108 = vmatprep.subr.bf16.mxu0 0
    %109 = vmatpush1.bf16.msra.mxu0 0
    %110 = vmatprep.subr.bf16.mxu0 0
    %111 = vmatpush1.bf16.msra.mxu0 0
    %112 = vmatprep.subr.bf16.mxu0 0
    %113 = vmatpush1.bf16.msra.mxu0 0
    %114 = vmatprep.subr.bf16.mxu0 0
    %115 = vmatpush1.bf16.msra.mxu0 0
    %116 = vmatprep.subr.bf16.mxu0 0
    %117 = vmatpush1.bf16.msra.mxu0 0
    %118 = vmatprep.subr.bf16.mxu0 0
    %119 = vmatpush1.bf16.msra.mxu0 0
    %120 = vmatprep.subr.bf16.mxu0 0
    %121 = vmatpush1.bf16.msra.mxu0 0
    %122 = vmatprep.subr.bf16.mxu0 0
    %123 = vmatpush1.bf16.msra.mxu0 0
    %124 = vmatprep.subr.bf16.mxu0 0
    %125 = vmatpush1.bf16.msra.mxu0 0
    %126 = vmatprep.subr.bf16.mxu0 0
    %127 = vmatpush1.bf16.msra.mxu0 0
    %128 = vmatprep.subr.bf16.mxu0 0
    %129 = vmatpush1.bf16.msra.mxu0 0
    %130 = vmatprep.subr.bf16.mxu0 0
    %131 = vmatpush1.bf16.msra.mxu0 0
    %132 = vmatprep.mubr.bf16.mxu0 0
    %133 = vmatmul.mubr.bf16.gmra.mrb[0].mxu0 %v98
    %v134 = vpop.f32.mrb[0].mxu0
    %v135 = vadd.f32 %v70, %v134
    %v136 = vpop.f32.mrb[0].mxu0
    %v137 = vpop.f32.mrb[0].mxu0
    %v138 = vpop.f32.mrb[0].mxu0
    %139 = vdwg.mxu0
    %v140 = vmax.f32 %v135, 0.0
    %v141 = vld [vmem:[#allocation2] sm:$0x3]
    %v142 = vpack.c.bf16 %v140, %v140
    %v143 = vld [vmem:[#allocation6] sm:$0xf]
    %v144 = vld [vmem:[#allocation6 + $0x4] sm:$0xf]
    %v145 = vld [vmem:[#allocation6 + $0x8] sm:$0xf]
    %v146 = vld [vmem:[#allocation6 + $0xc] sm:$0xf]
    %v147 = vld [vmem:[#allocation6 + $0x10] sm:$0xf]
    %v148 = vld [vmem:[#allocation6 + $0x14] sm:$0xf]
    %v149 = vld [vmem:[#allocation6 + $0x18] sm:$0xf]
    %v150 = vld [vmem:[#allocation6 + $0x1c] sm:$0xf]
    %v151 = vld [vmem:[#allocation6 + $0x20] sm:$0xf]
    %v152 = vld [vmem:[#allocation6 + $0x24] sm:$0xf]
    %v153 = vld [vmem:[#allocation6 + $0x28] sm:$0xf]
    %v154 = vld [vmem:[#allocation6 + $0x2c] sm:$0xf]
    %v155 = vld [vmem:[#allocation6 + $0x30] sm:$0xf]
    %v156 = vld [vmem:[#allocation6 + $0x34] sm:$0xf]
    %v157 = vld [vmem:[#allocation6 + $0x38] sm:$0xf]
    %v158 = vld [vmem:[#allocation6 + $0x3c] sm:$0xf]
    %v175 = vunpack.c.l.b16 %v143
    %v176 = vunpack.c.l.b16 %v144
    %v177 = vunpack.c.l.b16 %v145
    %v178 = vunpack.c.l.b16 %v146
    %v179 = vunpack.c.l.b16 %v147
    %v180 = vunpack.c.l.b16 %v148
    %v181 = vunpack.c.l.b16 %v149
    %v182 = vunpack.c.l.b16 %v150
    %v183 = vunpack.c.l.b16 %v151
    %v184 = vunpack.c.l.b16 %v152
    %v185 = vunpack.c.l.b16 %v153
    %v186 = vunpack.c.l.b16 %v154
    %v187 = vunpack.c.l.b16 %v155
    %v188 = vunpack.c.l.b16 %v156
    %v189 = vunpack.c.l.b16 %v157
    %v190 = vunpack.c.l.b16 %v158
    %v191 = vpack.c.b16 %v176, %v175
    %v192 = vpack.c.b16 %v178, %v177
    %v193 = vpack.c.b16 %v180, %v179
    %v194 = vpack.c.b16 %v182, %v181
    %v195 = vpack.c.b16 %v184, %v183
    %v196 = vpack.c.b16 %v186, %v185
    %v197 = vpack.c.b16 %v188, %v187
    %v198 = vpack.c.b16 %v190, %v189
    %207 = vmatprep.subr.bf16.mxu0 0
    %208 = vmatpush1.bf16.msra.mxu0 %v191
    %209 = vmatprep.subr.bf16.mxu0 0
    %210 = vmatpush1.bf16.msra.mxu0 %v192
    %211 = vmatprep.subr.bf16.mxu0 0
    %212 = vmatpush1.bf16.msra.mxu0 %v193
    %213 = vmatprep.subr.bf16.mxu0 0
    %214 = vmatpush1.bf16.msra.mxu0 %v194
    %215 = vmatprep.subr.bf16.mxu0 0
    %216 = vmatpush1.bf16.msra.mxu0 %v195
    %217 = vmatprep.subr.bf16.mxu0 0
    %218 = vmatpush1.bf16.msra.mxu0 %v196
    %219 = vmatprep.subr.bf16.mxu0 0
    %220 = vmatpush1.bf16.msra.mxu0 %v197
    %221 = vmatprep.subr.bf16.mxu0 0
    %222 = vmatpush1.bf16.msra.mxu0 %v198
    %223 = vmatprep.subr.bf16.mxu0 0
    %224 = vmatpush1.bf16.msra.mxu0 0
    %225 = vmatprep.subr.bf16.mxu0 0
    %226 = vmatpush1.bf16.msra.mxu0 0
    %227 = vmatprep.subr.bf16.mxu0 0
    %228 = vmatpush1.bf16.msra.mxu0 0
    %229 = vmatprep.subr.bf16.mxu0 0
    %230 = vmatpush1.bf16.msra.mxu0 0
    %231 = vmatprep.subr.bf16.mxu0 0
    %232 = vmatpush1.bf16.msra.mxu0 0
    %233 = vmatprep.subr.bf16.mxu0 0
    %234 = vmatpush1.bf16.msra.mxu0 0
    %235 = vmatprep.subr.bf16.mxu0 0
    %236 = vmatpush1.bf16.msra.mxu0 0
    %237 = vmatprep.subr.bf16.mxu0 0
    %238 = vmatpush1.bf16.msra.mxu0 0
    %239 = vmatprep.mubr.bf16.mxu0 0
    %240 = vmatmul.mubr.bf16.gmra.mrb[0].mxu0 %v142
    %v241 = vpop.f32.mrb[0].mxu0
    %v242 = vadd.f32 0.0, %v241
    %v243 = vpop.f32.mrb[0].mxu0
    %v244 = vpop.f32.mrb[0].mxu0
    %v245 = vpop.f32.mrb[0].mxu0
    %246 = vdwg.mxu0
    %v247 = vadd.f32 %v141, %v242
    %248 = vst [vmem:[#allocation2] sm:$0x3] %v247
    // Predicated region
    $region34: #{forward.1} parent=1 // pred_check
      %p249 = pneg %p50
    $region35: #{forward.1} parent=1 // pred_check_branch
      %251 = sbr.rel (%p249) target = $region37
    $region36: #{forward.1} parent=1 // pred_region
      %v252 = vld [vmem:[#allocation2] sm:$0x3]
      %v253 = vld [vmem:[%s4] sm:$0x1]
      %v255 = vlaneseq
      %v256 = vshrl.u32 %v255, 7
      %v257 = vsub.s32 0, %v256
      %v258 = vrot.slane %v253, %v257
      %v260 = vadd.f32 %v252, %v258
      %261 = vst [vmem:[#allocation8] sm:$0x3] %v260
    $region37: #{forward.1} parent=1 // pred_fallthru
      _
    // Predicated region
    $region38: #{forward.1} parent=1 // pred_check
      _
    $region39: #{forward.1} parent=1 // pred_check_branch
      %263 = sbr.rel (0) target = $region41
    $region40: #{forward.1} parent=1 // pred_region
      %s265 = ssub.s32 32, 32
      %266 = vsyncadd [#allocation5], %s265
      %s268 = sshll.u32 [#allocation8], 4
      %s269 = int_to_ptr.vmem [resolvable:$true] %s268
      %271 = dma.vmem_to_hbm [thread:$0]  %s269, 32, %s5, [#allocation5]
    $region41: #{forward.1} parent=1 // pred_fallthru
      _
    // Predicated region
    $region42: #{forward.1} parent=1 // pred_check
      _
    $region43: #{forward.1} parent=1 // pred_check_branch
      %273 = sbr.rel (0) target = $region45
    $region44: #{forward.1} parent=1 // pred_region
      %274 = dma.done [#allocation5], 32
    $region45: #{forward.1} parent=1 // pred_fallthru
      _
    %275 = vsyncpa [#allocation4], 1
    %276 = vsyncpa [#allocation7], 1
    %277 = vsyncpa [#allocation5], 1

</llo_original>
